<compile_context>
chip_gen: v6e
topology: v6e:2x2x1
jax: 0.10.0
libtpu: 0.0.40
codegen_flags: <defaults>
</compile_context>

<pallas_src>
import numpy as np
import jax
import jax.numpy as jnp
from jax.experimental import pallas as pl
from jax.experimental.pallas import tpu as pltpu


def _round_up(x: int, m: int) -> int:
    return (x + m - 1) // m * m


def edge_encoding_kernel(scores_ref, inv_ref, out_ref):
    # scores: (M, TP)  per-position path scores, pair index on the lane axis (lane-dense).
    # inv:    (1, TP)  1/len(path) per pair, 0 for pairs with no path.
    # out:    (1, TP)  masked mean over path positions.
    total = jnp.sum(scores_ref[...], axis=0, keepdims=True)   # (1, TP) sublane reduce, full lanes
    out_ref[...] = total * inv_ref[...]


def edge_encoding_pallas(edge_attr, edge_vector, paths_dense, *, pair_tile: int = 8192):
    """
    edge_attr:    (num_edges, E) f32
    edge_vector:  (M, E) f32 learned parameter
    paths_dense:  (N, N, M) int32, -1 padded (missing path positions / no path)
    returns cij:  (N, N) f32
    """
    N = paths_dense.shape[0]
    M, E = edge_vector.shape
    num_edges = edge_attr.shape[0]
    P = N * N

    # One-time tiny matmul: S[e, m] = <edge_attr[e], edge_vector[m]>.  HIGHEST precision keeps
    # f32 dot-product accuracy; cost is negligible (num_edges x M x E).
    S = jnp.dot(edge_attr, edge_vector.T,
                preferred_element_type=jnp.float32,
                precision=jax.lax.Precision.HIGHEST)                      # (num_edges, M)
    # Zero sentinel row (index == num_edges) for -1 / padded path slots; flatten for a 1-D gather.
    S_flat = jnp.concatenate([S, jnp.zeros((1, M), jnp.float32)], axis=0).reshape(-1)

    # Lane-dense index layout: pair index on the last axis.
    paths_mp = paths_dense.reshape(P, M).T                                # (M, P) int32
    valid = paths_mp >= 0
    safe = jnp.where(valid, paths_mp, num_edges)
    flat_idx = safe * M + jnp.arange(M, dtype=jnp.int32)[:, None]
    scores_t = S_flat[flat_idx]                                           # (M, P) f32, flat gather

    cnt = jnp.sum(valid, axis=0).astype(jnp.float32)                      # (P,)
    inv = jnp.where(cnt > 0.0, 1.0 / jnp.maximum(cnt, 1.0), 0.0)[None, :]  # (1, P), 0 => no path

    # Tile the pair axis; pad to a multiple of the tile (padded lanes carry inv==0 -> output 0).
    TP = min(_round_up(pair_tile, 128), _round_up(P, 128))
    P_pad = _round_up(P, TP)
    scores_t = jnp.pad(scores_t, ((0, 0), (0, P_pad - P)))                # (M, P_pad)
    inv = jnp.pad(inv, ((0, 0), (0, P_pad - P)))                          # (1, P_pad)

    out = pl.pallas_call(
        edge_encoding_kernel,
        out_shape=jax.ShapeDtypeStruct((1, P_pad), jnp.float32),
        grid_spec=pltpu.PrefetchScalarGridSpec(
            num_scalar_prefetch=0,
            grid=(P_pad // TP,),
            in_specs=[
                pl.BlockSpec((M, TP), lambda i: (0, i)),   # M == full array dim -> legal block
                pl.BlockSpec((1, TP), lambda i: (0, i)),
            ],
            out_specs=pl.BlockSpec((1, TP), lambda i: (0, i)),
        ),
        compiler_params=pltpu.CompilerParams(
            dimension_semantics=("parallel",),             # megacore sharding on v7x, no-op v5e/v6e
            vmem_limit_bytes=32 * 1024 * 1024,
        ),
    )(scores_t, inv)

    return out[0, :P].reshape(N, N)


if __name__ == "__main__":
    key = jax.random.PRNGKey(0)

    N = 12                   # number of nodes (x.shape[0])
    node_dim = 16
    edge_dim = 4             # edge_dim in __init__
    max_path_distance = 5    # max_path_distance in __init__
    num_edges = 20

    k1, k2, k3 = jax.random.split(key, 3)
    x = jax.random.normal(k1, (N, node_dim), jnp.float32)   # only its shape[0] matters
    edge_attr = jax.random.normal(k2, (num_edges, edge_dim), jnp.float32)
    # deterministic init of nn.Parameter(torch.randn(max_path_distance, edge_dim))
    edge_vector = jax.random.normal(k3, (max_path_distance, edge_dim), jnp.float32)

    # deterministic edge_paths dict {src: {dst: [edge indices]}} (some longer than M -> truncation)
    edge_paths = {}
    for src in range(N):
        for dst in range(N):
            if src != dst and (src + dst) % 3 == 0:
                L = ((src * 7 + dst * 3) % (max_path_distance + 2)) + 1
                path = [(src * 5 + dst * 11 + i * 13) % num_edges for i in range(L)]
                edge_paths.setdefault(src, {})[dst] = path

    # host-side densification of the python dict into (N, N, M) int32, -1 padded
    # (glue; no Pallas equivalent for python dict traversal)
    paths_np = -np.ones((N, N, max_path_distance), dtype=np.int32)
    for src in edge_paths:
        for dst in edge_paths[src]:
            p = edge_paths[src][dst][:max_path_distance]
            paths_np[src, dst, : len(p)] = p
    paths_dense = jnp.asarray(paths_np)

    # pure-numpy reference with the exact PyTorch loop semantics
    ea = np.asarray(edge_attr)
    ev = np.asarray(edge_vector)
    ref = np.zeros((N, N), np.float32)
    for src in edge_paths:
        for dst in edge_paths[src]:
            p = edge_paths[src][dst][:max_path_distance]
            w = list(range(len(p)))
            ref[src, dst] = np.mean(np.sum(ev[w] * ea[p], axis=1))
    ref = np.nan_to_num(ref)

    # default tile (single grid step for this small P)
    cij = jax.block_until_ready(edge_encoding_pallas(edge_attr, edge_vector, paths_dense))
    assert np.allclose(np.asarray(cij), ref, atol=1e-5, rtol=1e-5), "mismatch (default tile)"

    # small tile to exercise multi-step grid + padded tail (P=144 -> P_pad=256, grid=2)
    cij2 = jax.block_until_ready(
        edge_encoding_pallas(edge_attr, edge_vector, paths_dense, pair_tile=128))
    assert np.allclose(np.asarray(cij2), ref, atol=1e-5, rtol=1e-5), "mismatch (tiled)"

    print("KERNEL_OK")
</pallas_src>

<mosaic_0001>
module attributes {stable_mosaic.version = 11 : i64} {
  func.func @edge_encoding_kernel(%arg0: i32, %arg1: memref<5x256xf32, #tpu.memory_space<vmem>>, %arg2: memref<1x256xf32, #tpu.memory_space<vmem>>, %arg3: memref<1x256xf32, #tpu.memory_space<vmem>>) attributes {dimension_semantics = [#tpu.dimension_semantics<parallel>], iteration_bounds = array<i64: 1>, scalar_prefetch = 0 : i64, scratch_operands = 0 : i64, tpu.core_type = #tpu.core_type<tc>, window_params = [{transform_indices = @transform_0, window_bounds = array<i64: 5, 256>}, {transform_indices = @transform_1, window_bounds = array<i64: 1, 256>}, {transform_indices = @transform_2, window_bounds = array<i64: 1, 256>}]} {
    %c0 = arith.constant 0 : index
    %c0_0 = arith.constant 0 : index
    %0 = vector.load %arg1[%c0, %c0_0] : memref<5x256xf32, #tpu.memory_space<vmem>>, vector<5x256xf32>
    %cst = arith.constant dense<0.000000e+00> : vector<256xf32>
    %1 = vector.multi_reduction <add>, %0, %cst [0] : vector<5x256xf32> to vector<256xf32>
    %2 = vector.shape_cast %1 : vector<256xf32> to vector<1x256xf32>
    %c0_1 = arith.constant 0 : index
    %c0_2 = arith.constant 0 : index
    %3 = vector.load %arg2[%c0_1, %c0_2] : memref<1x256xf32, #tpu.memory_space<vmem>>, vector<1x256xf32>
    %4 = arith.mulf %2, %3 : vector<1x256xf32>
    %c0_3 = arith.constant 0 : index
    %c0_4 = arith.constant 0 : index
    %5 = vector.load %arg3[%c0_3, %c0_4] : memref<1x256xf32, #tpu.memory_space<vmem>>, vector<1x256xf32>
    tpu.vector_store %arg3[%c0_3, %c0_4], %4 {strides = array<i32>} : memref<1x256xf32, #tpu.memory_space<vmem>>, vector<1x256xf32>,
    return
  }
  func.func @transform_0(%arg0: i32) -> (i32, i32) {
    %c0_i32 = arith.constant 0 : i32
    %c0_i32_0 = arith.constant 0 : i32
    return %c0_i32, %arg0 : i32, i32
  }
  func.func @transform_1(%arg0: i32) -> (i32, i32) {
    %c0_i32 = arith.constant 0 : i32
    %c0_i32_0 = arith.constant 0 : i32
    return %c0_i32, %arg0 : i32, i32
  }
  func.func @transform_2(%arg0: i32) -> (i32, i32) {
    %c0_i32 = arith.constant 0 : i32
    %c0_i32_0 = arith.constant 0 : i32
    return %c0_i32, %arg0 : i32, i32
  }
}

</mosaic_0001>

<llo_original>
// kernel: tpu_custom_call.1
$region0: #{tpu_custom_call.1}
  #allocation0 [shape = 'u32[]', space=smem, size = 0x4, offset = 0x4, fixed_abs, tag = 'smem constant byte address 0x4 - core index']
  #allocation1 [shape = 'u32[144,128]{1,0:T(1,128)}', space=vmem, size = 0x12000, scoped, tag = 'internal scratch']
  %s0 = inlined_call_operand.hbm [shape: f32[5,256], index: 0, kind: input, shape index: {}]
  %s1 = inlined_call_operand.hbm [shape: f32[1,256], index: 1, kind: input, shape index: {}]
  %s2 = inlined_call_operand.hbm [shape: f32[1,256], index: 2, kind: output, shape index: {}]
  %s3 = sld [smem:[#allocation0]]
  $region26: #{tpu_custom_call.1} parent=0
    _
  %s5 = ssub.s32 1, %s3
  %s6 = scalar_select 0, %s5, %s3
  $region1: #{tpu_custom_call.1} parent=0
    #allocation2 [shape = 'u8[8192]{0}', space=vmem, size = 0x2000, scoped, tag = 'input window, operand 0, single buffered']
    #allocation3 [shape = 's32[1]{0}', space=sflag, size = 0x4, scoped, tag = 'scoped memory for tpu_custom_call.1']
    #allocation4 [shape = 's32[1]{0}', space=sflag, size = 0x4, scoped, tag = 'scoped memory for tpu_custom_call.1']
    #allocation5 [shape = 'u8[1024]{0}', space=vmem, size = 0x400, scoped, tag = 'input window, operand 1, single buffered']
    #allocation6 [shape = 's32[1]{0}', space=sflag, size = 0x4, scoped, tag = 'scoped memory for tpu_custom_call.1']
    #allocation7 [shape = 'u8[1024]{0}', space=vmem, size = 0x400, scoped, tag = 'output window, operand 0, single buffered']
    %7 = vsyncpa [#allocation3], 0
    %8 = vsyncpa [#allocation6], 0
    %9 = vsyncpa [#allocation4], 0
    // Predicated region
    $region2: #{tpu_custom_call.1} parent=1 // pred_check
      _
    $region3: #{tpu_custom_call.1} parent=1 // pred_check_branch
      %11 = sbr.rel (0) target = $region5
    $region4: #{tpu_custom_call.1} parent=1 // pred_region
      %s13 = ssub.s32 256, 256
      %14 = vsyncadd [#allocation3], %s13
      %s16 = sshll.u32 [#allocation2], 4
      %s17 = int_to_ptr.vmem [resolvable:$true] %s16
      %19 = dma.hbm_to_vmem [thread:$0]  %s0, 256, %s17, [#allocation3]
    $region5: #{tpu_custom_call.1} parent=1 // pred_fallthru
      _
    // Predicated region
    $region6: #{tpu_custom_call.1} parent=1 // pred_check
      _
    $region7: #{tpu_custom_call.1} parent=1 // pred_check_branch
      %21 = sbr.rel (0) target = $region9
    $region8: #{tpu_custom_call.1} parent=1 // pred_region
      %s23 = ssub.s32 32, 32
      %24 = vsyncadd [#allocation6], %s23
      %s26 = sshll.u32 [#allocation5], 4
      %s27 = int_to_ptr.vmem [resolvable:$true] %s26
      %29 = dma.hbm_to_vmem [thread:$0]  %s1, 32, %s27, [#allocation6]
    $region9: #{tpu_custom_call.1} parent=1 // pred_fallthru
      _
    // Predicated region
    $region10: #{tpu_custom_call.1} parent=1 // pred_check
      _
    $region11: #{tpu_custom_call.1} parent=1 // pred_check_branch
      %31 = sbr.rel (0) target = $region13
    $region12: #{tpu_custom_call.1} parent=1 // pred_region
      %32 = dma.done [#allocation3], 256
    $region13: #{tpu_custom_call.1} parent=1 // pred_fallthru
      _
    // Predicated region
    $region14: #{tpu_custom_call.1} parent=1 // pred_check
      _
    $region15: #{tpu_custom_call.1} parent=1 // pred_check_branch
      %34 = sbr.rel (0) target = $region17
    $region16: #{tpu_custom_call.1} parent=1 // pred_region
      %35 = dma.done [#allocation6], 32
    $region17: #{tpu_custom_call.1} parent=1 // pred_fallthru
      _
    %v36 = vld [vmem:[#allocation2] sm:$0x1f]
    %v37 = vld [vmem:[#allocation2 + $0x8] sm:$0x1f]
    %vm38 = vcmask 1044480
    %v39 = vsel %vm38, %v36, 0.0
    %v40 = vrot.slane %v39, 4
    %v41 = vadd.f32 %v39, %v40
    %v42 = vrot.slane %v41, 2
    %v43 = vadd.f32 %v41, %v42
    %v44 = vrot.slane %v43, 1
    %v45 = vadd.f32 %v43, %v44
    %v46 = vsel %vm38, %v37, 0.0
    %v47 = vrot.slane %v46, 4
    %v48 = vadd.f32 %v46, %v47
    %v49 = vrot.slane %v48, 2
    %v50 = vadd.f32 %v48, %v49
    %v51 = vrot.slane %v50, 1
    %v52 = vadd.f32 %v50, %v51
    %v53 = vld [vmem:[#allocation5] sm:$0x3]
    %v55 = vlaneseq
    %v56 = vshrl.u32 %v55, 7
    %v57 = vsub.s32 0, %v56
    %v58 = vrot.slane %v53, %v57
    %v59 = vlaneseq
    %v60 = vshrl.u32 %v59, 7
    %v61 = vsub.s32 1, %v60
    %v62 = vrot.slane %v53, %v61
    %v65 = vmul.f32 %v45, %v58
    %v66 = vmul.f32 %v52, %v62
    %v69 = vcombine.low %v65, %v66
    %v71 = vunpack.c.l.s4 1966171168
    %v72 = vunpack.c.0.s8 %v71
    %v73 = vlaneseq
    %v74 = vshrl.u32 %v73, 7
    %v75 = vsub.s32 %v72, %v74
    %v76 = vrot.slane %v69, %v75
    %v78 = vunpack.c.l.s4 1966171168
    %v79 = vunpack.c.0.s8 %v78
    %v80 = vlaneseq
    %v81 = vshrl.u32 %v80, 7
    %v82 = vsub.s32 %v79, %v81
    %v83 = vrot.slane %v76, %v82
    %v85 = vlaneseq
    %vm86 = vcmp.ge.s32.totalorder %v85, 0
    %vm87 = vcmp.lt.s32.totalorder %v85, 256
    %vm88 = vmand %vm86, %vm87
    %89 = vst.msk [vmem:[#allocation7] sm:$0x3] %vm88, %v83
    // Predicated region
    $region18: #{tpu_custom_call.1} parent=1 // pred_check
      _
    $region19: #{tpu_custom_call.1} parent=1 // pred_check_branch
      %91 = sbr.rel (0) target = $region21
    $region20: #{tpu_custom_call.1} parent=1 // pred_region
      %s93 = ssub.s32 32, 32
      %94 = vsyncadd [#allocation4], %s93
      %s96 = sshll.u32 [#allocation7], 4
      %s97 = int_to_ptr.vmem [resolvable:$true] %s96
      %99 = dma.vmem_to_hbm [thread:$0]  %s97, 32, %s2, [#allocation4]
    $region21: #{tpu_custom_call.1} parent=1 // pred_fallthru
      _
    // Predicated region
    $region22: #{tpu_custom_call.1} parent=1 // pred_check
      _
    $region23: #{tpu_custom_call.1} parent=1 // pred_check_branch
      %101 = sbr.rel (0) target = $region25
    $region24: #{tpu_custom_call.1} parent=1 // pred_region
      %102 = dma.done [#allocation4], 32
    $region25: #{tpu_custom_call.1} parent=1 // pred_fallthru
      _
    %103 = vsyncpa [#allocation3], 1
    %104 = vsyncpa [#allocation6], 1
    %105 = vsyncpa [#allocation4], 1

</llo_original>
